<compile_context>
chip_gen: v6e
topology: v6e:2x2x1
jax: 0.10.0
libtpu: 0.0.40
codegen_flags: <defaults>
</compile_context>

<pallas_src>
import functools

import jax
import jax.numpy as jnp
from jax.experimental import pallas as pl
from jax.experimental.pallas import tpu as pltpu

ALPHA = 0.25
GAMMA = 2.0          # statically 2.0 -> squared on the VPU inside the kernel
LANES = 128
MAX_TILE_ROWS = 1024  # 1024x128 f32 tile = 512 KiB; 2 inputs x 2 buffers = 2 MiB


def _focal_kernel(pred_ref, target_ref, out_ref, acc_pos, acc_neg, acc_cnt):
    """One (tile_rows, 128) tile per grid step.

    VMEM accumulators (persist across the sequential grid):
      acc_pos : per-element loss restricted to positives
      acc_neg : per-element loss restricted to negatives
      acc_cnt : positive-element indicator
    out_ref (SMEM, shape (3,)) is written once on the last step:
      [0] sum(loss_pos)   [1] sum(loss_neg)   [2] count(positives)
    """
    step = pl.program_id(0)

    @pl.when(step == 0)
    def _init():
        acc_pos[...] = jnp.zeros_like(acc_pos)
        acc_neg[...] = jnp.zeros_like(acc_neg)
        acc_cnt[...] = jnp.zeros_like(acc_cnt)

    p = pred_ref[...].astype(jnp.float32)
    t = target_ref[...].astype(jnp.float32)

    pos = t > 0.8

    # Fused branches: q = p on positives, 1 - p on negatives.  One log + one
    # square per element.  Padded elements (p = 0, t = 0) give q = 1 -> loss 0.
    q = jnp.where(pos, p, 1.0 - p)
    coef = jnp.where(pos, jnp.float32(ALPHA), jnp.float32(1.0 - ALPHA))
    one_m_q = 1.0 - q
    loss = coef * (one_m_q * one_m_q) * jnp.log(jnp.clip(q, 1e-4, 1.0))

    zero = jnp.zeros_like(loss)
    acc_pos[...] += jnp.where(pos, loss, zero)
    acc_neg[...] += jnp.where(pos, zero, loss)
    acc_cnt[...] += pos.astype(jnp.float32)

    @pl.when(step == pl.num_programs(0) - 1)
    def _finalize():
        out_ref[0] = jnp.sum(acc_pos[...])
        out_ref[1] = jnp.sum(acc_neg[...])
        out_ref[2] = jnp.sum(acc_cnt[...])


@functools.partial(jax.jit, static_argnames=("size_average",))
def focal_loss(pred, target, size_average=True):
    n = pred.size  # static true element count (before padding)

    # Flatten (mirrors pred.view(-1, 1) / target.view(-1, 1)); keep native dtype.
    p = pred.reshape(-1)
    t = target.reshape(-1)

    # Lane-dense [rows, 128] layout.  Pad rows to a multiple of 8 (sublane
    # granularity); pick the largest tile <= MAX_TILE_ROWS and, for large
    # inputs, pad rows up to a whole number of tiles.  Padding is pred=0 /
    # target=0, which contributes exactly 0 to every partial sum.
    rows = -(-n // LANES)
    rows8 = -(-rows // 8) * 8
    tile_rows = min(MAX_TILE_ROWS, rows8)
    rows_pad = -(-rows8 // tile_rows) * tile_rows
    pad = rows_pad * LANES - n
    if pad:  # static at trace time; no-op pads are skipped entirely
        p = jnp.pad(p, (0, pad))
        t = jnp.pad(t, (0, pad))
    p2 = p.reshape(rows_pad, LANES)
    t2 = t.reshape(rows_pad, LANES)

    grid = (rows_pad // tile_rows,)
    block = pl.BlockSpec((tile_rows, LANES), lambda i: (i, 0))

    sums = pl.pallas_call(
        _focal_kernel,
        out_shape=jax.ShapeDtypeStruct((3,), jnp.float32),
        grid_spec=pltpu.PrefetchScalarGridSpec(
            num_scalar_prefetch=0,
            grid=grid,
            in_specs=[block, block],
            out_specs=pl.BlockSpec(memory_space=pltpu.MemorySpace.SMEM),
            scratch_shapes=[
                pltpu.VMEM((tile_rows, LANES), jnp.float32),  # acc_pos
                pltpu.VMEM((tile_rows, LANES), jnp.float32),  # acc_neg
                pltpu.VMEM((tile_rows, LANES), jnp.float32),  # acc_cnt
            ],
        ),
        compiler_params=pltpu.CompilerParams(
            dimension_semantics=("arbitrary",)),
    )(p2, t2)

    sum_pos, sum_neg, cnt_pos = sums[0], sums[1], sums[2]
    cnt_neg = jnp.float32(n) - cnt_pos  # n is static; padding never counted
    if size_average:
        # Matches -loss_pos.mean() - loss_neg.mean() (NaN if a branch is empty,
        # same as PyTorch's mean of an empty tensor).
        return -(sum_pos / cnt_pos) - (sum_neg / cnt_neg)
    else:
        return sum_pos

# TODO(synk): the code after `return focal_loss` in the PyTorch module
# (torch.cat / class_mask.scatter_) is unreachable dead code and is not
# translated.


def _focal_loss_ref(pred, target, alpha=ALPHA, gamma=GAMMA, size_average=True):
    p = pred.reshape(-1).astype(jnp.float32)
    t = target.reshape(-1).astype(jnp.float32)
    pos = t > 0.8
    loss_pos = alpha * (1.0 - p) ** gamma * jnp.log(jnp.clip(p, 1e-4, 1.0))
    loss_neg = (1.0 - alpha) * p ** gamma * jnp.log(jnp.clip(1.0 - p, 1e-4, 1.0))
    sum_pos = jnp.sum(jnp.where(pos, loss_pos, 0.0))
    cnt_pos = jnp.sum(pos.astype(jnp.float32))
    sum_neg = jnp.sum(jnp.where(~pos, loss_neg, 0.0))
    cnt_neg = jnp.sum((~pos).astype(jnp.float32))
    if size_average:
        return -(sum_pos / cnt_pos) - (sum_neg / cnt_neg)
    return sum_pos


if __name__ == "__main__":
    key = jax.random.PRNGKey(0)
    k1, k2 = jax.random.split(key)
    # Small shapes consistent with a dense prediction head: NCHW [2, 4, 16, 16].
    pred = jax.random.uniform(k1, (2, 4, 16, 16), dtype=jnp.float32)
    target = (jax.random.uniform(k2, (2, 4, 16, 16)) > 0.7).astype(jnp.float32)

    out_mean = jax.block_until_ready(focal_loss(pred, target, size_average=True))
    out_sum = jax.block_until_ready(focal_loss(pred, target, size_average=False))

    ref_mean = _focal_loss_ref(pred, target, size_average=True)
    ref_sum = _focal_loss_ref(pred, target, size_average=False)

    assert jnp.allclose(out_mean, ref_mean, rtol=1e-5, atol=1e-5), (out_mean, ref_mean)
    assert jnp.allclose(out_sum, ref_sum, rtol=1e-5, atol=1e-5), (out_sum, ref_sum)

    print("KERNEL_OK")
</pallas_src>

<mosaic_0001>
module attributes {stable_mosaic.version = 11 : i64} {
  func.func @_focal_kernel(%arg0: i32, %arg1: memref<16x128xf32, #tpu.memory_space<vmem>>, %arg2: memref<16x128xf32, #tpu.memory_space<vmem>>, %arg3: memref<3xf32, #tpu.memory_space<smem>>, %arg4: memref<16x128xf32, #tpu.memory_space<vmem>>, %arg5: memref<16x128xf32, #tpu.memory_space<vmem>>, %arg6: memref<16x128xf32, #tpu.memory_space<vmem>>) attributes {dimension_semantics = [#tpu.dimension_semantics<arbitrary>], iteration_bounds = array<i64: 1>, scalar_prefetch = 0 : i64, scratch_operands = 3 : i64, tpu.core_type = #tpu.core_type<tc>, window_params = [{transform_indices = @transform_0, window_bounds = array<i64: 16, 128>}, {transform_indices = @transform_1, window_bounds = array<i64: 16, 128>}, {transform_indices = @transform_2, window_bounds = array<i64: 3>}]} {
    %c0_i32 = arith.constant 0 : i32
    %0 = arith.cmpi eq, %arg0, %c0_i32 : i32
    %1 = arith.extui %0 : i1 to i32
    %c0_i32_0 = arith.constant 0 : i32
    %2 = arith.cmpi ne, %1, %c0_i32_0 : i32
    scf.if %2 {
      %cst_25 = arith.constant 0.000000e+00 : f32
      %40 = vector.broadcast %cst_25 : f32 to vector<16x128xf32>
      %c0_26 = arith.constant 0 : index
      %c0_27 = arith.constant 0 : index
      %41 = vector.load %arg4[%c0_26, %c0_27] : memref<16x128xf32, #tpu.memory_space<vmem>>, vector<16x128xf32>
      tpu.vector_store %arg4[%c0_26, %c0_27], %40 {strides = array<i32>} : memref<16x128xf32, #tpu.memory_space<vmem>>, vector<16x128xf32>,
      %cst_28 = arith.constant 0.000000e+00 : f32
      %42 = vector.broadcast %cst_28 : f32 to vector<16x128xf32>
      %c0_29 = arith.constant 0 : index
      %c0_30 = arith.constant 0 : index
      %43 = vector.load %arg5[%c0_29, %c0_30] : memref<16x128xf32, #tpu.memory_space<vmem>>, vector<16x128xf32>
      tpu.vector_store %arg5[%c0_29, %c0_30], %42 {strides = array<i32>} : memref<16x128xf32, #tpu.memory_space<vmem>>, vector<16x128xf32>,
      %cst_31 = arith.constant 0.000000e+00 : f32
      %44 = vector.broadcast %cst_31 : f32 to vector<16x128xf32>
      %c0_32 = arith.constant 0 : index
      %c0_33 = arith.constant 0 : index
      %45 = vector.load %arg6[%c0_32, %c0_33] : memref<16x128xf32, #tpu.memory_space<vmem>>, vector<16x128xf32>
      tpu.vector_store %arg6[%c0_32, %c0_33], %44 {strides = array<i32>} : memref<16x128xf32, #tpu.memory_space<vmem>>, vector<16x128xf32>,
    } else {
    }
    %c0 = arith.constant 0 : index
    %c0_1 = arith.constant 0 : index
    %3 = vector.load %arg1[%c0, %c0_1] : memref<16x128xf32, #tpu.memory_space<vmem>>, vector<16x128xf32>
    %c0_2 = arith.constant 0 : index
    %c0_3 = arith.constant 0 : index
    %4 = vector.load %arg2[%c0_2, %c0_3] : memref<16x128xf32, #tpu.memory_space<vmem>>, vector<16x128xf32>
    %cst = arith.constant 8.000000e-01 : f32
    %5 = vector.broadcast %cst : f32 to vector<16x128xf32>
    %6 = arith.cmpf ogt, %4, %5 : vector<16x128xf32>
    %cst_4 = arith.constant 1.000000e+00 : f32
    %7 = vector.broadcast %cst_4 : f32 to vector<16x128xf32>
    %8 = arith.subf %7, %3 : vector<16x128xf32>
    %9 = arith.select %6, %3, %8 : vector<16x128xi1>, vector<16x128xf32>
    %cst_5 = arith.constant 2.500000e-01 : f32
    %cst_6 = arith.constant 7.500000e-01 : f32
    %10 = vector.broadcast %cst_5 : f32 to vector<16x128xf32>
    %11 = vector.broadcast %cst_6 : f32 to vector<16x128xf32>
    %12 = arith.select %6, %10, %11 : vector<16x128xi1>, vector<16x128xf32>
    %cst_7 = arith.constant 1.000000e+00 : f32
    %13 = vector.broadcast %cst_7 : f32 to vector<16x128xf32>
    %14 = arith.subf %13, %9 : vector<16x128xf32>
    %15 = arith.mulf %14, %14 : vector<16x128xf32>
    %16 = arith.mulf %12, %15 : vector<16x128xf32>
    %cst_8 = arith.constant 9.99999974E-5 : f32
    %cst_9 = arith.constant 1.000000e+00 : f32
    %17 = vector.broadcast %cst_8 : f32 to vector<16x128xf32>
    %18 = arith.maximumf %17, %9 : vector<16x128xf32>
    %19 = vector.broadcast %cst_9 : f32 to vector<16x128xf32>
    %20 = arith.minimumf %19, %18 : vector<16x128xf32>
    %21 = math.log %20 : vector<16x128xf32>
    %22 = arith.mulf %16, %21 : vector<16x128xf32>
    %cst_10 = arith.constant 0.000000e+00 : f32
    %23 = vector.broadcast %cst_10 : f32 to vector<16x128xf32>
    %c0_11 = arith.constant 0 : index
    %c0_12 = arith.constant 0 : index
    %24 = vector.load %arg4[%c0_11, %c0_12] : memref<16x128xf32, #tpu.memory_space<vmem>>, vector<16x128xf32>
    %25 = arith.select %6, %22, %23 : vector<16x128xi1>, vector<16x128xf32>
    %26 = arith.addf %24, %25 : vector<16x128xf32>
    %c0_13 = arith.constant 0 : index
    %c0_14 = arith.constant 0 : index
    %27 = vector.load %arg4[%c0_13, %c0_14] : memref<16x128xf32, #tpu.memory_space<vmem>>, vector<16x128xf32>
    tpu.vector_store %arg4[%c0_13, %c0_14], %26 {strides = array<i32>} : memref<16x128xf32, #tpu.memory_space<vmem>>, vector<16x128xf32>,
    %c0_15 = arith.constant 0 : index
    %c0_16 = arith.constant 0 : index
    %28 = vector.load %arg5[%c0_15, %c0_16] : memref<16x128xf32, #tpu.memory_space<vmem>>, vector<16x128xf32>
    %29 = arith.select %6, %23, %22 : vector<16x128xi1>, vector<16x128xf32>
    %30 = arith.addf %28, %29 : vector<16x128xf32>
    %c0_17 = arith.constant 0 : index
    %c0_18 = arith.constant 0 : index
    %31 = vector.load %arg5[%c0_17, %c0_18] : memref<16x128xf32, #tpu.memory_space<vmem>>, vector<16x128xf32>
    tpu.vector_store %arg5[%c0_17, %c0_18], %30 {strides = array<i32>} : memref<16x128xf32, #tpu.memory_space<vmem>>, vector<16x128xf32>,
    %c0_19 = arith.constant 0 : index
    %c0_20 = arith.constant 0 : index
    %32 = vector.load %arg6[%c0_19, %c0_20] : memref<16x128xf32, #tpu.memory_space<vmem>>, vector<16x128xf32>
    %33 = arith.extui %6 : vector<16x128xi1> to vector<16x128xi32>
    %34 = arith.sitofp %33 : vector<16x128xi32> to vector<16x128xf32>
    %35 = arith.addf %32, %34 : vector<16x128xf32>
    %c0_21 = arith.constant 0 : index
    %c0_22 = arith.constant 0 : index
    %36 = vector.load %arg6[%c0_21, %c0_22] : memref<16x128xf32, #tpu.memory_space<vmem>>, vector<16x128xf32>
    tpu.vector_store %arg6[%c0_21, %c0_22], %35 {strides = array<i32>} : memref<16x128xf32, #tpu.memory_space<vmem>>, vector<16x128xf32>,
    %c0_i32_23 = arith.constant 0 : i32
    %37 = arith.cmpi eq, %arg0, %c0_i32_23 : i32
    %38 = arith.extui %37 : i1 to i32
    %c0_i32_24 = arith.constant 0 : i32
    %39 = arith.cmpi ne, %38, %c0_i32_24 : i32
    scf.if %39 {
      %c0_25 = arith.constant 0 : index
      %c0_26 = arith.constant 0 : index
      %40 = vector.load %arg4[%c0_25, %c0_26] : memref<16x128xf32, #tpu.memory_space<vmem>>, vector<16x128xf32>
      %41 = vector.shape_cast %40 : vector<16x128xf32> to vector<1x16x128xf32>
      %cst_27 = arith.constant dense<0.000000e+00> : vector<1xf32>
      %42 = vector.multi_reduction <add>, %41, %cst_27 [1, 2] : vector<1x16x128xf32> to vector<1xf32>
      %43 = vector.shape_cast %42 : vector<1xf32> to vector<1x1x1xf32>
      %44 = vector.extract %43[0, 0, 0] : f32 from vector<1x1x1xf32>
      %c0_28 = arith.constant 0 : index
      %45 = memref.load %arg3[%c0_28] : memref<3xf32, #tpu.memory_space<smem>>
      memref.store %44, %arg3[%c0_28] : memref<3xf32, #tpu.memory_space<smem>>
      %c0_29 = arith.constant 0 : index
      %c0_30 = arith.constant 0 : index
      %46 = vector.load %arg5[%c0_29, %c0_30] : memref<16x128xf32, #tpu.memory_space<vmem>>, vector<16x128xf32>
      %47 = vector.shape_cast %46 : vector<16x128xf32> to vector<1x16x128xf32>
      %cst_31 = arith.constant dense<0.000000e+00> : vector<1xf32>
      %48 = vector.multi_reduction <add>, %47, %cst_31 [1, 2] : vector<1x16x128xf32> to vector<1xf32>
      %49 = vector.shape_cast %48 : vector<1xf32> to vector<1x1x1xf32>
      %50 = vector.extract %49[0, 0, 0] : f32 from vector<1x1x1xf32>
      %c1 = arith.constant 1 : index
      %51 = memref.load %arg3[%c1] : memref<3xf32, #tpu.memory_space<smem>>
      memref.store %50, %arg3[%c1] : memref<3xf32, #tpu.memory_space<smem>>
      %c0_32 = arith.constant 0 : index
      %c0_33 = arith.constant 0 : index
      %52 = vector.load %arg6[%c0_32, %c0_33] : memref<16x128xf32, #tpu.memory_space<vmem>>, vector<16x128xf32>
      %53 = vector.shape_cast %52 : vector<16x128xf32> to vector<1x16x128xf32>
      %cst_34 = arith.constant dense<0.000000e+00> : vector<1xf32>
      %54 = vector.multi_reduction <add>, %53, %cst_34 [1, 2] : vector<1x16x128xf32> to vector<1xf32>
      %55 = vector.shape_cast %54 : vector<1xf32> to vector<1x1x1xf32>
      %56 = vector.extract %55[0, 0, 0] : f32 from vector<1x1x1xf32>
      %c2 = arith.constant 2 : index
      %57 = memref.load %arg3[%c2] : memref<3xf32, #tpu.memory_space<smem>>
      memref.store %56, %arg3[%c2] : memref<3xf32, #tpu.memory_space<smem>>
    } else {
    }
    return
  }
  func.func @transform_0(%arg0: i32) -> (i32, i32) {
    %c0_i32 = arith.constant 0 : i32
    %c0_i32_0 = arith.constant 0 : i32
    return %arg0, %c0_i32 : i32, i32
  }
  func.func @transform_1(%arg0: i32) -> (i32, i32) {
    %c0_i32 = arith.constant 0 : i32
    %c0_i32_0 = arith.constant 0 : i32
    return %arg0, %c0_i32 : i32, i32
  }
  func.func @transform_2(%arg0: i32) -> i32 {
    %c0_i32 = arith.constant 0 : i32
    %c0_i32_0 = arith.constant 0 : i32
    return %c0_i32 : i32
  }
}

</mosaic_0001>

<llo_original>
// kernel: focal_loss.1
$region0: #{focal_loss.1}
  #allocation0 [shape = 'u32[]', space=smem, size = 0x4, offset = 0x4, fixed_abs, tag = 'smem constant byte address 0x4 - core index']
  #allocation1 [shape = 'u32[144,128]{1,0:T(1,128)}', space=vmem, size = 0x12000, scoped, tag = 'internal scratch']
  #allocation2 [shape = 'f32[16,128]{1,0:T(8,128)}', space=vmem, size = 0x2000, scoped, tag = 'scratch operand']
  #allocation3 [shape = 'f32[16,128]{1,0:T(8,128)}', space=vmem, size = 0x2000, scoped, tag = 'scratch operand']
  #allocation4 [shape = 'f32[16,128]{1,0:T(8,128)}', space=vmem, size = 0x2000, scoped, tag = 'scratch operand']
  %s0 = inlined_call_operand.vmem [shape: f32[16,128], index: 0, kind: input, shape index: {}]
  %s1 = inlined_call_operand.vmem [shape: f32[16,128], index: 1, kind: input, shape index: {}]
  %s2 = inlined_call_operand.vmem [shape: f32[3], index: 2, kind: output, shape index: {}]
  %s3 = sld [smem:[#allocation0]]
  $region26: #{focal_loss.1} parent=0
    _
  %s5 = ssub.s32 1, %s3
  %s6 = scalar_select 0, %s5, %s3
  $region1: #{focal_loss.1} parent=0
    #allocation5 [shape = 'u8[512]{0}', space=smem, size = 0x200, scoped, tag = 'output window, operand 0, single buffered']
    #allocation6 [shape = 's32[1]{0}', space=sflag, size = 0x4, scoped, tag = 'scoped memory for focal_loss.1']
    %7 = vsyncpa [#allocation6], 0
    // Predicated region
    $region2: #{focal_loss.1} parent=1 // pred_check
      _
    $region3: #{focal_loss.1} parent=1 // pred_check_branch
      %9 = sbr.rel (0) target = $region5
    $region4: #{focal_loss.1} parent=1 // pred_region
      _
    $region5: #{focal_loss.1} parent=1 // pred_fallthru
      _
    // Predicated region
    $region6: #{focal_loss.1} parent=1 // pred_check
      _
    $region7: #{focal_loss.1} parent=1 // pred_check_branch
      %11 = sbr.rel (0) target = $region9
    $region8: #{focal_loss.1} parent=1 // pred_region
      _
    $region9: #{focal_loss.1} parent=1 // pred_fallthru
      _
    %p12 = scmp.eq.s32.totalorder 0, 0
    // Predicated region
    $region10: #{focal_loss.1} parent=1 // pred_check
      %p13 = pneg %p12
    $region11: #{focal_loss.1} parent=1 // pred_check_branch
      %15 = sbr.rel (%p13) target = $region13
    $region12: #{focal_loss.1} parent=1 // pred_region
      %16 = vst [vmem:[#allocation2] sm:$0xff] 0.0
      %17 = vst [vmem:[#allocation2 + $0x8] sm:$0xff] 0.0
      %18 = vst [vmem:[#allocation3] sm:$0xff] 0.0
      %19 = vst [vmem:[#allocation3 + $0x8] sm:$0xff] 0.0
      %20 = vst [vmem:[#allocation4] sm:$0xff] 0.0
      %21 = vst [vmem:[#allocation4 + $0x8] sm:$0xff] 0.0
    $region13: #{focal_loss.1} parent=1 // pred_fallthru
      _
    %v22 = vld [vmem:[%s0] sm:$0xff]
    %v23 = vld [vmem:[%s0 + $0x8] sm:$0xff]
    %v24 = vld [vmem:[%s1] sm:$0xff]
    %v25 = vld [vmem:[%s1 + $0x8] sm:$0xff]
    %vm26 = vcmp.gt.f32.partialorder %v24, 0.8
    %vm27 = vcmp.gt.f32.partialorder %v25, 0.8
    %v28 = vsub.f32 1.0, %v22
    %v29 = vsub.f32 1.0, %v23
    %v30 = vsel %vm26, %v22, %v28
    %v31 = vsel %vm27, %v23, %v29
    %v32 = vsel %vm26, 0.25, 0.75
    %v33 = vsel %vm27, 0.25, 0.75
    %v34 = vsub.f32 1.0, %v30
    %v35 = vsub.f32 1.0, %v31
    %v36 = vmul.f32 %v34, %v34
    %v37 = vmul.f32 %v35, %v35
    %v38 = vmul.f32 %v32, %v36
    %v39 = vmul.f32 %v33, %v37
    %v40 = vmax.f32 %v30, 0.0001
    %v41 = vmax.f32 %v31, 0.0001
    %v42 = vmin.f32 %v40, 1.0
    %v43 = vmin.f32 %v41, 1.0
    %v44 = vlog2.pop %v42
    %v45 = vmul.f32 %v44, 0.6931472
    %v46 = vlog2.pop %v43
    %v47 = vmul.f32 %v46, 0.6931472
    %v48 = vmul.f32 %v38, %v45
    %v49 = vmul.f32 %v39, %v47
    %v50 = vld [vmem:[#allocation2] sm:$0xff]
    %v51 = vld [vmem:[#allocation2 + $0x8] sm:$0xff]
    %v52 = vsel %vm26, %v48, 0.0
    %v53 = vsel %vm27, %v49, 0.0
    %v54 = vadd.f32 %v50, %v52
    %v55 = vadd.f32 %v51, %v53
    %56 = vst [vmem:[#allocation2] sm:$0xff] %v54
    %57 = vst [vmem:[#allocation2 + $0x8] sm:$0xff] %v55
    %v58 = vld [vmem:[#allocation3] sm:$0xff]
    %v59 = vld [vmem:[#allocation3 + $0x8] sm:$0xff]
    %v60 = vsel %vm26, 0.0, %v48
    %v61 = vsel %vm27, 0.0, %v49
    %v62 = vadd.f32 %v58, %v60
    %v63 = vadd.f32 %v59, %v61
    %64 = vst [vmem:[#allocation3] sm:$0xff] %v62
    %65 = vst [vmem:[#allocation3 + $0x8] sm:$0xff] %v63
    %v66 = vld [vmem:[#allocation4] sm:$0xff]
    %v67 = vld [vmem:[#allocation4 + $0x8] sm:$0xff]
    %v68 = vsel %vm26, 1, 0
    %v69 = vsel %vm27, 1, 0
    %v70 = vcvt.s32.f32 %v68
    %v71 = vcvt.s32.f32 %v69
    %v72 = vadd.f32 %v66, %v70
    %v73 = vadd.f32 %v67, %v71
    %74 = vst [vmem:[#allocation4] sm:$0xff] %v72
    %75 = vst [vmem:[#allocation4 + $0x8] sm:$0xff] %v73
    // Predicated region
    $region14: #{focal_loss.1} parent=1 // pred_check
      %p76 = pneg %p12
    $region15: #{focal_loss.1} parent=1 // pred_check_branch
      %78 = sbr.rel (%p76) target = $region17
    $region16: #{focal_loss.1} parent=1 // pred_region
      %v79 = vld [vmem:[#allocation2] sm:$0xff]
      %v80 = vld [vmem:[#allocation2 + $0x8] sm:$0xff]
      %v81 = vadd.f32 %v79, %v80
      %82 = vadd.xlane.f32.xlu0 %v81
      %v83 = vpop.xlane.xlu0 %82
      %v84 = vrot.slane %v83, 4
      %v85 = vadd.f32 %v83, %v84
      %v86 = vrot.slane %v85, 2
      %v87 = vadd.f32 %v85, %v86
      %v88 = vrot.slane %v87, 1
      %v89 = vadd.f32 %v87, %v88
      %s90 = vtos %v89
      %s91 = scalar_lea.smem [#allocation5], 0
      %92 = sst [smem:[%s91]] %s90
      %v93 = vld [vmem:[#allocation3] sm:$0xff]
      %v94 = vld [vmem:[#allocation3 + $0x8] sm:$0xff]
      %v95 = vadd.f32 %v93, %v94
      %96 = vadd.xlane.f32.xlu0 %v95
      %v97 = vpop.xlane.xlu0 %96
      %v98 = vrot.slane %v97, 4
      %v99 = vadd.f32 %v97, %v98
      %v100 = vrot.slane %v99, 2
      %v101 = vadd.f32 %v99, %v100
      %v102 = vrot.slane %v101, 1
      %v103 = vadd.f32 %v101, %v102
      %s104 = vtos %v103
      %s105 = scalar_lea.smem [#allocation5], 1
      %106 = sst [smem:[%s105]] %s104
      %v107 = vld [vmem:[#allocation4] sm:$0xff]
      %v108 = vld [vmem:[#allocation4 + $0x8] sm:$0xff]
      %v109 = vadd.f32 %v107, %v108
      %110 = vadd.xlane.f32.xlu0 %v109
      %v111 = vpop.xlane.xlu0 %110
      %v112 = vrot.slane %v111, 4
      %v113 = vadd.f32 %v111, %v112
      %v114 = vrot.slane %v113, 2
      %v115 = vadd.f32 %v113, %v114
      %v116 = vrot.slane %v115, 1
      %v117 = vadd.f32 %v115, %v116
      %s118 = vtos %v117
      %s119 = scalar_lea.smem [#allocation5], 2
      %120 = sst [smem:[%s119]] %s118
    $region17: #{focal_loss.1} parent=1 // pred_fallthru
      _
    // Predicated region
    $region18: #{focal_loss.1} parent=1 // pred_check
      _
    $region19: #{focal_loss.1} parent=1 // pred_check_branch
      %122 = sbr.rel (0) target = $region21
    $region20: #{focal_loss.1} parent=1 // pred_region
      %s124 = ssub.s32 16, 16
      %125 = vsyncadd [#allocation6], %s124
      %s127 = sshll.u32 %s2, 4
      %s128 = int_to_ptr.vmem [resolvable:$true] %s127
      %130 = dma.smem_to_vmem [#allocation5], 16, %s128, [#allocation6]
    $region21: #{focal_loss.1} parent=1 // pred_fallthru
      _
    // Predicated region
    $region22: #{focal_loss.1} parent=1 // pred_check
      _
    $region23: #{focal_loss.1} parent=1 // pred_check_branch
      %132 = sbr.rel (0) target = $region25
    $region24: #{focal_loss.1} parent=1 // pred_region
      %133 = dma.done [#allocation6], 16
    $region25: #{focal_loss.1} parent=1 // pred_fallthru
      _
    %134 = sfence
    %135 = vsyncpa [#allocation6], 1

</llo_original>
